<compile_context>
chip_gen: v5e
topology: v5e:2x2
jax: 0.10.0
libtpu: 0.0.40
codegen_flags: <defaults>
</compile_context>

<pallas_src>
import jax
import jax.numpy as jnp
from jax.experimental import pallas as pl
from jax.experimental.pallas import tpu as pltpu


def normalization(adj: jnp.ndarray) -> jnp.ndarray:
    """Row-normalize adj + I  (matches Dif_cov.normalization)."""
    v = adj.shape[0]
    adjacency = adj + jnp.eye(v, dtype=adj.dtype)
    deg = adjacency.sum(axis=1)                      # row degrees (>= 1)
    inv_deg = jnp.where(deg > 0, 1.0 / deg, 0.0)     # 1/degree, inf -> 0
    return inv_deg[:, None] * adjacency              # d_diffusion @ adjacency


def _dif_cov_kernel(a_big_ref, x_ref, o_ref):
    # a_big_ref: (V*L, V*L)  kron(adj_one, I_L), resident across the grid
    # x_ref:     (TB, V*L)   contiguous rows of x.reshape(N*C, V*L)
    # o_ref:     (TB, V*L)
    # out[b, w*L + l] = sum_v x[b, v*L + l] * adj[v, w]
    out = jnp.dot(x_ref[...], a_big_ref[...],
                  preferred_element_type=jnp.float32)
    o_ref[...] = out.astype(o_ref.dtype)


def _round_up(x: int, mult: int) -> int:
    return ((x + mult - 1) // mult) * mult


def _vmem_capacity_bytes() -> int:
    try:
        info = pltpu.get_tpu_info()
        return int(getattr(info, "vmem_capacity_bytes", 64 << 20))
    except Exception:
        return 64 << 20          # conservative (v7x-sized) fallback


def _num_tensorcores() -> int:
    """Best-effort: v5e / v6e have 1 TC per chip; assume 2 otherwise (v7x)."""
    try:
        kind = jax.devices()[0].device_kind.lower().replace(" ", "")
    except Exception:
        return 2
    if any(t in kind for t in ("v5lite", "v5e", "v6lite", "v6e")):
        return 1
    return 2


def _pick_tile_rows(b: int, vl: int, itemsize: int, a_big_bytes: int,
                    num_tc: int) -> tuple[int, int]:
    """Row-tile TB (multiple of 8 or == b) and vmem_limit_bytes per chip gen."""
    cap = _vmem_capacity_bytes()
    if cap >= (100 << 20):       # v5e / v6e: 128 MiB physical VMEM
        vmem_limit = 96 << 20
    else:                        # v7x: 64 MiB physical VMEM
        vmem_limit = 40 << 20
    # 4 streaming buffers per step (double-buffered input + output), plus the
    # resident kron block (conservatively x2) and some headroom.
    stream_budget = max(vmem_limit - 2 * a_big_bytes - (4 << 20), 4 << 20)
    tb = stream_budget // (4 * vl * itemsize)
    tb = max(8, (tb // 8) * 8)
    if b <= 8:
        return b, vmem_limit
    if tb >= b:
        tb = b                                   # one full-size tile
        if num_tc >= 2 and b >= 16:
            # Guarantee >= 2 "parallel" tiles so both TensorCores are used.
            tb = _round_up((b + 1) // 2, 8)
    return tb, vmem_limit


def dif_cov_forward(x: jnp.ndarray, adj_one: jnp.ndarray) -> jnp.ndarray:
    """x: (N, C, V, L), adj_one: (V, V)  ->  (N, C, V, L)."""
    n, c, v, l = x.shape
    b = n * c
    vl = v * l
    itemsize = jnp.dtype(x.dtype).itemsize

    # Free (contiguous) relayout: no HBM pass, just metadata.
    x2 = x.reshape(b, vl)

    # Fold the per-timestep structure into the matmul: out2 = x2 @ kron(adj, I_L).
    a_big = jnp.kron(adj_one.astype(x.dtype), jnp.eye(l, dtype=x.dtype))

    tb, vmem_limit = _pick_tile_rows(b, vl, itemsize, vl * vl * itemsize,
                                     _num_tensorcores())
    grid = (pl.cdiv(b, tb),)     # ragged tail is fine: rows are independent

    out2 = pl.pallas_call(
        _dif_cov_kernel,
        out_shape=jax.ShapeDtypeStruct((b, vl), x.dtype),
        grid_spec=pltpu.PrefetchScalarGridSpec(
            num_scalar_prefetch=0,
            grid=grid,
            in_specs=[
                # kron(adj, I): constant block index -> resident, DMA'd once.
                pl.BlockSpec((vl, vl), lambda i: (0, 0)),
                # x: one lane-dense (TB, V*L) row-slab per step.
                pl.BlockSpec((tb, vl), lambda i: (i, 0)),
            ],
            out_specs=pl.BlockSpec((tb, vl), lambda i: (i, 0)),
        ),
        compiler_params=pltpu.CompilerParams(
            dimension_semantics=("parallel",),
            vmem_limit_bytes=vmem_limit,
        ),
    )(a_big, x2)

    return out2.reshape(n, c, v, l)   # free reshape, no transpose


if __name__ == "__main__":
    key = jax.random.PRNGKey(0)
    k_adj, k_x = jax.random.split(key)

    N, C, V, L = 2, 4, 16, 16

    # Deterministic synthetic adjacency (non-negative) and input.
    adj = jax.random.uniform(k_adj, (V, V), dtype=jnp.float32)
    adj = (adj > 0.5).astype(jnp.float32)          # sparse-ish 0/1 adjacency
    x = jax.random.normal(k_x, (N, C, V, L), dtype=jnp.float32)

    adj_one = normalization(adj)

    out = dif_cov_forward(x, adj_one)
    out = jax.block_until_ready(out)

    # Reference check against plain-JAX einsum (same as torch.einsum semantics).
    ref = jnp.einsum('ncvl,vw->ncwl', x, adj_one)
    assert out.shape == (N, C, V, L)
    assert jnp.allclose(out, ref, atol=5e-5, rtol=5e-5)

    print("KERNEL_OK")
</pallas_src>

<mosaic_0001>
module attributes {stable_mosaic.version = 11 : i64} {
  func.func @_dif_cov_kernel(%arg0: i32, %arg1: memref<256x256xf32, #tpu.memory_space<vmem>>, %arg2: memref<8x256xf32, #tpu.memory_space<vmem>>, %arg3: memref<8x256xf32, #tpu.memory_space<vmem>>) attributes {dimension_semantics = [#tpu.dimension_semantics<parallel>], iteration_bounds = array<i64: 1>, scalar_prefetch = 0 : i64, scratch_operands = 0 : i64, tpu.core_type = #tpu.core_type<tc>, window_params = [{pipeline_mode = #tpu.pipeline_mode<synchronous>, transform_indices = @transform_0, window_bounds = array<i64: 256, 256>}, {transform_indices = @transform_1, window_bounds = array<i64: 8, 256>}, {transform_indices = @transform_2, window_bounds = array<i64: 8, 256>}]} {
    %c0 = arith.constant 0 : index
    %c0_0 = arith.constant 0 : index
    %0 = vector.load %arg2[%c0, %c0_0] : memref<8x256xf32, #tpu.memory_space<vmem>>, vector<8x256xf32>
    %c0_1 = arith.constant 0 : index
    %c0_2 = arith.constant 0 : index
    %1 = vector.load %arg1[%c0_1, %c0_2] : memref<256x256xf32, #tpu.memory_space<vmem>>, vector<256x256xf32>
    %cst = arith.constant dense<0.000000e+00> : vector<8x256xf32>
    %2 = tpu.matmul %0, %1, %cst {dimension_numbers = #tpu.dot_dimension_numbers<[1], [0], [0], [1], [0, 0, 1, 1], [], []>} : vector<8x256xf32>, vector<256x256xf32>, vector<8x256xf32> -> vector<8x256xf32>
    %c0_3 = arith.constant 0 : index
    %c0_4 = arith.constant 0 : index
    %3 = vector.load %arg3[%c0_3, %c0_4] : memref<8x256xf32, #tpu.memory_space<vmem>>, vector<8x256xf32>
    tpu.vector_store %arg3[%c0_3, %c0_4], %2 {strides = array<i32>} : memref<8x256xf32, #tpu.memory_space<vmem>>, vector<8x256xf32>,
    return
  }
  func.func @transform_0(%arg0: i32) -> (i32, i32) {
    %c0_i32 = arith.constant 0 : i32
    %c0_i32_0 = arith.constant 0 : i32
    %c0_i32_1 = arith.constant 0 : i32
    return %c0_i32, %c0_i32_0 : i32, i32
  }
  func.func @transform_1(%arg0: i32) -> (i32, i32) {
    %c0_i32 = arith.constant 0 : i32
    %c0_i32_0 = arith.constant 0 : i32
    return %arg0, %c0_i32 : i32, i32
  }
  func.func @transform_2(%arg0: i32) -> (i32, i32) {
    %c0_i32 = arith.constant 0 : i32
    %c0_i32_0 = arith.constant 0 : i32
    return %arg0, %c0_i32 : i32, i32
  }
}

</mosaic_0001>

<llo_original>
// kernel: tpu_custom_call.1
$region0: #{tpu_custom_call.1}
  #allocation0 [shape = 'u32[]', space=smem, size = 0x4, offset = 0x4, fixed_abs, tag = 'smem constant byte address 0x4 - core index']
  #allocation1 [shape = 'u32[72,128]{1,0:T(1,128)}', space=vmem, size = 0x9000, scoped, tag = 'internal scratch']
  %s0 = inlined_call_operand.hbm [shape: f32[256,256], index: 0, kind: input, shape index: {}]
  %s1 = inlined_call_operand.hbm [shape: f32[8,256], index: 1, kind: input, shape index: {}]
  %s2 = inlined_call_operand.hbm [shape: f32[8,256], index: 2, kind: output, shape index: {}]
  %s3 = sld [smem:[#allocation0]]
  $region26: #{tpu_custom_call.1} parent=0
    _
  %s5 = ssub.s32 1, %s3
  %s6 = scalar_select 0, %s5, %s3
  $region1: #{tpu_custom_call.1} parent=0
    #allocation2 [shape = 'u8[262144]{0}', space=vmem, size = 0x40000, scoped, tag = 'input window, operand 0, single buffered']
    #allocation3 [shape = 's32[1]{0}', space=sflag, size = 0x4, scoped, tag = 'scoped memory for tpu_custom_call.1']
    #allocation4 [shape = 's32[1]{0}', space=sflag, size = 0x4, scoped, tag = 'scoped memory for tpu_custom_call.1']
    #allocation5 [shape = 'u8[8192]{0}', space=vmem, size = 0x2000, scoped, tag = 'input window, operand 1, single buffered']
    #allocation6 [shape = 's32[1]{0}', space=sflag, size = 0x4, scoped, tag = 'scoped memory for tpu_custom_call.1']
    #allocation7 [shape = 'u8[8192]{0}', space=vmem, size = 0x2000, scoped, tag = 'output window, operand 0, single buffered']
    %7 = vsyncpa [#allocation3], 0
    %8 = vsyncpa [#allocation6], 0
    %9 = vsyncpa [#allocation4], 0
    // Predicated region
    $region2: #{tpu_custom_call.1} parent=1 // pred_check
      _
    $region3: #{tpu_custom_call.1} parent=1 // pred_check_branch
      %11 = sbr.rel (0) target = $region5
    $region4: #{tpu_custom_call.1} parent=1 // pred_region
      %13 = vsyncadd [#allocation3], 0
      %s14 = sshll.u32 %s0, 4
      %s15 = int_to_ptr.hbm [resolvable:$true] %s14
      %s16 = sshll.u32 [#allocation2], 4
      %s17 = int_to_ptr.vmem [resolvable:$true] %s16
      %22 = dma.hbm_to_vmem [thread:$0]  %s15, 8192, %s17, [#allocation3], 256, 256, 16
    $region5: #{tpu_custom_call.1} parent=1 // pred_fallthru
      _
    // Predicated region
    $region6: #{tpu_custom_call.1} parent=1 // pred_check
      _
    $region7: #{tpu_custom_call.1} parent=1 // pred_check_branch
      %24 = sbr.rel (0) target = $region9
    $region8: #{tpu_custom_call.1} parent=1 // pred_region
      %26 = vsyncadd [#allocation6], 0
      %s28 = sshll.u32 %s1, 4
      %s29 = int_to_ptr.hbm [resolvable:$true] %s28
      %s30 = sshll.u32 [#allocation5], 4
      %s31 = int_to_ptr.vmem [resolvable:$true] %s30
      %33 = dma.hbm_to_vmem [thread:$0]  %s29, 256, %s31, [#allocation6]
    $region9: #{tpu_custom_call.1} parent=1 // pred_fallthru
      _
    // Predicated region
    $region10: #{tpu_custom_call.1} parent=1 // pred_check
      _
    $region11: #{tpu_custom_call.1} parent=1 // pred_check_branch
      %35 = sbr.rel (0) target = $region13
    $region12: #{tpu_custom_call.1} parent=1 // pred_region
      %37 = dma.done [#allocation3], 8192
    $region13: #{tpu_custom_call.1} parent=1 // pred_fallthru
      _
    // Predicated region
    $region14: #{tpu_custom_call.1} parent=1 // pred_check
      _
    $region15: #{tpu_custom_call.1} parent=1 // pred_check_branch
      %39 = sbr.rel (0) target = $region17
    $region16: #{tpu_custom_call.1} parent=1 // pred_region
      %41 = dma.done [#allocation6], 256
    $region17: #{tpu_custom_call.1} parent=1 // pred_fallthru
      _
    %v42 = vld [vmem:[#allocation5] sm:$0xff]
    %v43 = vld [vmem:[#allocation5 + $0x8] sm:$0xff]
    %v44 = vld [vmem:[#allocation2] sm:$0xff]
    %v45 = vld [vmem:[#allocation2 + $0x8] sm:$0xff]
    %v46 = vld [vmem:[#allocation2 + $0x10] sm:$0xff]
    %v47 = vld [vmem:[#allocation2 + $0x18] sm:$0xff]
    %v48 = vld [vmem:[#allocation2 + $0x20] sm:$0xff]
    %v49 = vld [vmem:[#allocation2 + $0x28] sm:$0xff]
    %v50 = vld [vmem:[#allocation2 + $0x30] sm:$0xff]
    %v51 = vld [vmem:[#allocation2 + $0x38] sm:$0xff]
    %v52 = vld [vmem:[#allocation2 + $0x40] sm:$0xff]
    %v53 = vld [vmem:[#allocation2 + $0x48] sm:$0xff]
    %v54 = vld [vmem:[#allocation2 + $0x50] sm:$0xff]
    %v55 = vld [vmem:[#allocation2 + $0x58] sm:$0xff]
    %v56 = vld [vmem:[#allocation2 + $0x60] sm:$0xff]
    %v57 = vld [vmem:[#allocation2 + $0x68] sm:$0xff]
    %v58 = vld [vmem:[#allocation2 + $0x70] sm:$0xff]
    %v59 = vld [vmem:[#allocation2 + $0x78] sm:$0xff]
    %v60 = vld [vmem:[#allocation2 + $0x80] sm:$0xff]
    %v61 = vld [vmem:[#allocation2 + $0x88] sm:$0xff]
    %v62 = vld [vmem:[#allocation2 + $0x90] sm:$0xff]
    %v63 = vld [vmem:[#allocation2 + $0x98] sm:$0xff]
    %v64 = vld [vmem:[#allocation2 + $0xa0] sm:$0xff]
    %v65 = vld [vmem:[#allocation2 + $0xa8] sm:$0xff]
    %v66 = vld [vmem:[#allocation2 + $0xb0] sm:$0xff]
    %v67 = vld [vmem:[#allocation2 + $0xb8] sm:$0xff]
    %v68 = vld [vmem:[#allocation2 + $0xc0] sm:$0xff]
    %v69 = vld [vmem:[#allocation2 + $0xc8] sm:$0xff]
    %v70 = vld [vmem:[#allocation2 + $0xd0] sm:$0xff]
    %v71 = vld [vmem:[#allocation2 + $0xd8] sm:$0xff]
    %v72 = vld [vmem:[#allocation2 + $0xe0] sm:$0xff]
    %v73 = vld [vmem:[#allocation2 + $0xe8] sm:$0xff]
    %v74 = vld [vmem:[#allocation2 + $0xf0] sm:$0xff]
    %v75 = vld [vmem:[#allocation2 + $0xf8] sm:$0xff]
    %v76 = vld [vmem:[#allocation2 + $0x100] sm:$0xff]
    %v77 = vld [vmem:[#allocation2 + $0x108] sm:$0xff]
    %v78 = vld [vmem:[#allocation2 + $0x110] sm:$0xff]
    %v79 = vld [vmem:[#allocation2 + $0x118] sm:$0xff]
    %v80 = vld [vmem:[#allocation2 + $0x120] sm:$0xff]
    %v81 = vld [vmem:[#allocation2 + $0x128] sm:$0xff]
    %v82 = vld [vmem:[#allocation2 + $0x130] sm:$0xff]
    %v83 = vld [vmem:[#allocation2 + $0x138] sm:$0xff]
    %v84 = vld [vmem:[#allocation2 + $0x140] sm:$0xff]
    %v85 = vld [vmem:[#allocation2 + $0x148] sm:$0xff]
    %v86 = vld [vmem:[#allocation2 + $0x150] sm:$0xff]
    %v87 = vld [vmem:[#allocation2 + $0x158] sm:$0xff]
    %v88 = vld [vmem:[#allocation2 + $0x160] sm:$0xff]
    %v89 = vld [vmem:[#allocation2 + $0x168] sm:$0xff]
    %v90 = vld [vmem:[#allocation2 + $0x170] sm:$0xff]
    %v91 = vld [vmem:[#allocation2 + $0x178] sm:$0xff]
    %v92 = vld [vmem:[#allocation2 + $0x180] sm:$0xff]
    %v93 = vld [vmem:[#allocation2 + $0x188] sm:$0xff]
    %v94 = vld [vmem:[#allocation2 + $0x190] sm:$0xff]
    %v95 = vld [vmem:[#allocation2 + $0x198] sm:$0xff]
    %v96 = vld [vmem:[#allocation2 + $0x1a0] sm:$0xff]
    %v97 = vld [vmem:[#allocation2 + $0x1a8] sm:$0xff]
    %v98 = vld [vmem:[#allocation2 + $0x1b0] sm:$0xff]
    %v99 = vld [vmem:[#allocation2 + $0x1b8] sm:$0xff]
    %v100 = vld [vmem:[#allocation2 + $0x1c0] sm:$0xff]
    %v101 = vld [vmem:[#allocation2 + $0x1c8] sm:$0xff]
    %v102 = vld [vmem:[#allocation2 + $0x1d0] sm:$0xff]
    %v103 = vld [vmem:[#allocation2 + $0x1d8] sm:$0xff]
    %v104 = vld [vmem:[#allocation2 + $0x1e0] sm:$0xff]
    %v105 = vld [vmem:[#allocation2 + $0x1e8] sm:$0xff]
    %v106 = vld [vmem:[#allocation2 + $0x1f0] sm:$0xff]
    %v107 = vld [vmem:[#allocation2 + $0x1f8] sm:$0xff]
    %108 = vmatpush.msra.mxu0 %v74
    %109 = vmatpush.msra.mxu0 %v72
    %110 = vmatpush.msra.mxu0 %v70
    %111 = vmatpush.msra.mxu0 %v68
    %112 = vmatpush.msra.mxu0 %v66
    %113 = vmatpush.msra.mxu0 %v64
    %114 = vmatpush.msra.mxu0 %v62
    %115 = vmatpush.msra.mxu0 %v60
    %116 = vmatpush.msra.mxu0 %v58
    %117 = vmatpush.msra.mxu0 %v56
    %118 = vmatpush.msra.mxu0 %v54
    %119 = vmatpush.msra.mxu0 %v52
    %120 = vmatpush.msra.mxu0 %v50
    %121 = vmatpush.msra.mxu0 %v48
    %122 = vmatpush.msra.mxu0 %v46
    %123 = vmatpush.msra.mxu0 %v44
    %124 = vmatmul.f32.gmra.mxu0 %v42
    %v125 = vpop.f32.mrf.mxu0
    %v126 = vadd.f32 0.0, %v125
    %127 = vdwg.mxu0
    %128 = vmatpush.msra.mxu0 %v106
    %129 = vmatpush.msra.mxu0 %v104
    %130 = vmatpush.msra.mxu0 %v102
    %131 = vmatpush.msra.mxu0 %v100
    %132 = vmatpush.msra.mxu0 %v98
    %133 = vmatpush.msra.mxu0 %v96
    %134 = vmatpush.msra.mxu0 %v94
    %135 = vmatpush.msra.mxu0 %v92
    %136 = vmatpush.msra.mxu0 %v90
    %137 = vmatpush.msra.mxu0 %v88
    %138 = vmatpush.msra.mxu0 %v86
    %139 = vmatpush.msra.mxu0 %v84
    %140 = vmatpush.msra.mxu0 %v82
    %141 = vmatpush.msra.mxu0 %v80
    %142 = vmatpush.msra.mxu0 %v78
    %143 = vmatpush.msra.mxu0 %v76
    %144 = vmatmul.f32.gmra.mxu0 %v43
    %v145 = vpop.f32.mrf.mxu0
    %v146 = vadd.f32 %v126, %v145
    %147 = vdwg.mxu0
    %148 = vmatpush.msra.mxu0 %v75
    %149 = vmatpush.msra.mxu0 %v73
    %150 = vmatpush.msra.mxu0 %v71
    %151 = vmatpush.msra.mxu0 %v69
    %152 = vmatpush.msra.mxu0 %v67
    %153 = vmatpush.msra.mxu0 %v65
    %154 = vmatpush.msra.mxu0 %v63
    %155 = vmatpush.msra.mxu0 %v61
    %156 = vmatpush.msra.mxu0 %v59
    %157 = vmatpush.msra.mxu0 %v57
    %158 = vmatpush.msra.mxu0 %v55
    %159 = vmatpush.msra.mxu0 %v53
    %160 = vmatpush.msra.mxu0 %v51
    %161 = vmatpush.msra.mxu0 %v49
    %162 = vmatpush.msra.mxu0 %v47
    %163 = vmatpush.msra.mxu0 %v45
    %164 = vmatmul.f32.gmra.mxu0 %v42
    %v165 = vpop.f32.mrf.mxu0
    %v166 = vadd.f32 0.0, %v165
    %167 = vdwg.mxu0
    %168 = vmatpush.msra.mxu0 %v107
    %169 = vmatpush.msra.mxu0 %v105
    %170 = vmatpush.msra.mxu0 %v103
    %171 = vmatpush.msra.mxu0 %v101
    %172 = vmatpush.msra.mxu0 %v99
    %173 = vmatpush.msra.mxu0 %v97
    %174 = vmatpush.msra.mxu0 %v95
    %175 = vmatpush.msra.mxu0 %v93
    %176 = vmatpush.msra.mxu0 %v91
    %177 = vmatpush.msra.mxu0 %v89
    %178 = vmatpush.msra.mxu0 %v87
    %179 = vmatpush.msra.mxu0 %v85
    %180 = vmatpush.msra.mxu0 %v83
    %181 = vmatpush.msra.mxu0 %v81
    %182 = vmatpush.msra.mxu0 %v79
    %183 = vmatpush.msra.mxu0 %v77
    %184 = vmatmul.f32.gmra.mxu0 %v43
    %v185 = vpop.f32.mrf.mxu0
    %v186 = vadd.f32 %v166, %v185
    %187 = vdwg.mxu0
    %188 = vst [vmem:[#allocation7] sm:$0xff] %v146
    %189 = vst [vmem:[#allocation7 + $0x8] sm:$0xff] %v186
    // Predicated region
    $region18: #{tpu_custom_call.1} parent=1 // pred_check
      _
    $region19: #{tpu_custom_call.1} parent=1 // pred_check_branch
      %191 = sbr.rel (0) target = $region21
    $region20: #{tpu_custom_call.1} parent=1 // pred_region
      %193 = vsyncadd [#allocation4], 0
      %s195 = sshll.u32 [#allocation7], 4
      %s196 = int_to_ptr.vmem [resolvable:$true] %s195
      %s197 = sshll.u32 %s2, 4
      %s198 = int_to_ptr.hbm [resolvable:$true] %s197
      %200 = dma.vmem_to_hbm [thread:$0]  %s196, 256, %s198, [#allocation4]
    $region21: #{tpu_custom_call.1} parent=1 // pred_fallthru
      _
    // Predicated region
    $region22: #{tpu_custom_call.1} parent=1 // pred_check
      _
    $region23: #{tpu_custom_call.1} parent=1 // pred_check_branch
      %202 = sbr.rel (0) target = $region25
    $region24: #{tpu_custom_call.1} parent=1 // pred_region
      %204 = dma.done [#allocation4], 256
    $region25: #{tpu_custom_call.1} parent=1 // pred_fallthru
      _
    %205 = vsyncpa [#allocation3], 1
    %206 = vsyncpa [#allocation6], 1
    %207 = vsyncpa [#allocation4], 1

</llo_original>
